<compile_context>
chip_gen: v7x
topology: tpu7x:2x2x1
jax: 0.10.0
libtpu: 0.0.40
codegen_flags: <defaults>
</compile_context>

<pallas_src>
import functools

import jax
import jax.numpy as jnp
import numpy as np
from jax.experimental import pallas as pl
from jax.experimental.pallas import tpu as pltpu


def _round_up(x, m):
    return ((x + m - 1) // m) * m


def _vmem_capacity_bytes():
    """Generation-aware VMEM capacity (falls back to the smallest, v7x)."""
    try:
        info = pltpu.get_tpu_info()
        cap = int(getattr(info, "vmem_capacity_bytes", 0) or 0)
        if cap > 0:
            return cap
    except Exception:
        pass
    return 64 * 1024 * 1024


# ----------------------------------------------------------------------------
# Kernel 1: block-CSR sparse matmul  Y = A @ X  (bf16 MXU, f32 accumulation)
# ----------------------------------------------------------------------------
def _spmm_kernel(nnz_ref, kidx_ref, a_ref, x_ref, o_ref, acc_ref,
                 *, max_nnz, x_resident):
    i = pl.program_id(0)
    j = pl.program_id(1)

    @pl.when(j == 0)
    def _():
        acc_ref[...] = jnp.zeros_like(acc_ref)

    # Only real (non-padded) nonzero blocks do MXU work.  Padded steps also
    # issue no DMA because their index_map repeats the previous block index.
    @pl.when(j < nnz_ref[i])
    def _():
        if x_resident:
            t_k = a_ref.shape[1]
            kb = kidx_ref[i * max_nnz + j]
            off = pl.multiple_of(kb * t_k, t_k)
            x_blk = x_ref[pl.ds(off, t_k), :]
        else:
            x_blk = x_ref[...]
        acc_ref[...] += jnp.dot(a_ref[...], x_blk,
                                preferred_element_type=jnp.float32)

    @pl.when(j == pl.num_programs(1) - 1)
    def _():
        o_ref[...] = acc_ref[...].astype(o_ref.dtype)


def _choose_spmm_config(M, K, D, a_itemsize, x_itemsize, o_itemsize):
    """Pick (t_m, t_k), resident-X flag and vmem_limit from the HW budget."""
    cap = _vmem_capacity_bytes()
    budget = int(0.6 * cap)
    t_m = t_k = 128
    resident = False
    est = 0
    for t in (1024, 512, 256, 128):
        t_m = min(t, _round_up(M, 128))
        t_k = min(t, _round_up(K, 128))
        k_pad = _round_up(K, t_k)
        resident = 2 * k_pad * D * x_itemsize <= budget // 2
        x_rows = k_pad if resident else t_k
        est = (2 * t_m * t_k * a_itemsize       # A double buffer
               + 2 * x_rows * D * x_itemsize    # X buffers
               + 2 * t_m * D * o_itemsize       # output double buffer
               + t_m * D * 4)                   # f32 accumulator scratch
        if est <= budget:
            break
    vmem_limit = int(min(max(est + (4 << 20), 32 << 20), int(0.8 * cap)))
    return t_m, t_k, resident, vmem_limit


def _build_block_csr(mask_np):
    """Compacted nonzero-block index table (flattened 1-D for SMEM)."""
    g_m = mask_np.shape[0]
    nnz = mask_np.sum(axis=1).astype(np.int32)
    max_nnz = max(int(nnz.max()) if g_m else 0, 1)
    kidx = np.zeros((g_m, max_nnz), np.int32)
    for i in range(g_m):
        cols = np.nonzero(mask_np[i])[0].astype(np.int32)
        n = len(cols)
        if n > 0:
            kidx[i, :n] = cols
            kidx[i, n:] = cols[-1]   # repeat last index -> skipped steps re-DMA nothing
    return jnp.asarray(nnz), jnp.asarray(kidx.reshape(-1)), max_nnz


def _prepare_spmm(a, d, matmul_dtype):
    """Pad A, build block-CSR tables and the VMEM plan for Y = A @ X."""
    a = jnp.asarray(a)
    M, K = a.shape
    itemsize = jnp.dtype(matmul_dtype).itemsize
    t_m, t_k, resident, vmem_limit = _choose_spmm_config(
        M, K, d, itemsize, itemsize, itemsize)
    m_pad = _round_up(M, t_m)
    k_pad = _round_up(K, t_k)
    a_pad = a.astype(matmul_dtype)
    if (m_pad, k_pad) != (M, K):
        a_pad = jnp.pad(a_pad, ((0, m_pad - M), (0, k_pad - K)))
    g_m, g_k = m_pad // t_m, k_pad // t_k
    mask = np.asarray(
        jnp.abs(a_pad.astype(jnp.float32)).reshape(g_m, t_m, g_k, t_k)
        .sum(axis=(1, 3)) > 0)
    nnz, kidx, max_nnz = _build_block_csr(mask)
    return dict(a_pad=a_pad, nnz=nnz, kidx=kidx, max_nnz=max_nnz,
                t_m=t_m, t_k=t_k, M=M, K=K, M_pad=m_pad, K_pad=k_pad,
                d=d, resident=resident, vmem_limit=vmem_limit,
                dtype=matmul_dtype)


def spmm(tbl, x):
    """Y[:M] = A @ x using the prepared block-CSR tables (bf16 output)."""
    t_m, t_k = tbl["t_m"], tbl["t_k"]
    m_pad, k_pad = tbl["M_pad"], tbl["K_pad"]
    D = tbl["d"]
    max_nnz = tbl["max_nnz"]

    x = x.astype(tbl["dtype"])
    if x.shape[0] != k_pad:
        x = jnp.pad(x, ((0, k_pad - x.shape[0]), (0, 0)))
    g_m = m_pad // t_m

    a_spec = pl.BlockSpec(
        (t_m, t_k), lambda i, j, nnz, kidx: (i, kidx[i * max_nnz + j]))
    if tbl["resident"]:
        # X held resident in VMEM (constant index_map => DMA'd once).
        x_spec = pl.BlockSpec((k_pad, D), lambda i, j, nnz, kidx: (0, 0))
    else:
        x_spec = pl.BlockSpec(
            (t_k, D), lambda i, j, nnz, kidx: (kidx[i * max_nnz + j], 0))

    kernel = functools.partial(_spmm_kernel, max_nnz=max_nnz,
                               x_resident=tbl["resident"])
    out = pl.pallas_call(
        kernel,
        out_shape=jax.ShapeDtypeStruct((m_pad, D), tbl["dtype"]),
        grid_spec=pltpu.PrefetchScalarGridSpec(
            num_scalar_prefetch=2,
            grid=(g_m, max_nnz),
            in_specs=[a_spec, x_spec],
            out_specs=pl.BlockSpec((t_m, D), lambda i, j, nnz, kidx: (i, 0)),
            scratch_shapes=[pltpu.VMEM((t_m, D), jnp.float32)]),
        compiler_params=pltpu.CompilerParams(
            dimension_semantics=("parallel", "arbitrary"),
            vmem_limit_bytes=tbl["vmem_limit"]),
    )(tbl["nnz"], tbl["kidx"], tbl["a_pad"], x)
    return out[: tbl["M"]]


# ----------------------------------------------------------------------------
# Kernel 2: fused gather + score  score[b] = sum_d U[uid[b], d] * I[iid[b], d]
# ----------------------------------------------------------------------------
def _score_kernel(uid_ref, iid_ref, users_ref, items_ref, o_ref, *, bt):
    t = pl.program_id(0)
    lane = jax.lax.broadcasted_iota(jnp.int32, (1, bt), 1)

    def body(j, acc):
        b = t * bt + j
        u = users_ref[pl.ds(uid_ref[b], 1), :].astype(jnp.float32)   # (1, D)
        v = items_ref[pl.ds(iid_ref[b], 1), :].astype(jnp.float32)   # (1, D)
        s = jnp.sum(u * v)
        return jnp.where(lane == j, s, acc)

    o_ref[...] = jax.lax.fori_loop(0, bt, body, jnp.zeros((1, bt), jnp.float32))


def score(all_users, all_items, user_indices, item_indices, *, bt=128):
    """Row-wise dot product with the gather fused into the kernel."""
    B = int(user_indices.shape[0])
    D = all_users.shape[1]
    uid = jnp.asarray(user_indices).astype(jnp.int32)
    iid = jnp.asarray(item_indices).astype(jnp.int32)

    # If the full tables do not fit the VMEM budget, gather the batch rows in
    # JAX and index them with iota (same kernel, small resident tables).
    itemsize = jnp.dtype(all_users.dtype).itemsize
    tbl_bytes = (all_users.size + all_items.size) * itemsize
    if tbl_bytes > int(0.3 * _vmem_capacity_bytes()):
        all_users = all_users[uid]
        all_items = all_items[iid]
        uid = jnp.arange(B, dtype=jnp.int32)
        iid = jnp.arange(B, dtype=jnp.int32)

    bt = max(1, min(bt, B))
    ntiles = (B + bt - 1) // bt
    b_pad = ntiles * bt
    if b_pad != B:
        uid = jnp.pad(uid, (0, b_pad - B))
        iid = jnp.pad(iid, (0, b_pad - B))

    out = pl.pallas_call(
        functools.partial(_score_kernel, bt=bt),
        out_shape=jax.ShapeDtypeStruct((1, b_pad), jnp.float32),
        grid_spec=pltpu.PrefetchScalarGridSpec(
            num_scalar_prefetch=2,
            grid=(ntiles,),
            in_specs=[
                pl.BlockSpec((all_users.shape[0], D), lambda t, u, i: (0, 0)),
                pl.BlockSpec((all_items.shape[0], D), lambda t, u, i: (0, 0)),
            ],
            out_specs=pl.BlockSpec((1, bt), lambda t, u, i: (0, t))),
        compiler_params=pltpu.CompilerParams(
            dimension_semantics=("arbitrary",)),
    )(uid, iid, all_users, all_items)
    return out[0, :B]


# ----------------------------------------------------------------------------
# LightGCN module
# ----------------------------------------------------------------------------
class LightGCN:
    def __init__(self, num_users, num_items, embedding_dim, num_layers, key):
        self.num_users = num_users
        self.num_items = num_items
        self.embedding_dim = embedding_dim
        self.num_layers = num_layers

        ku, ki = jax.random.split(key)
        # xavier_uniform_: bound = sqrt(6 / (fan_in + fan_out))
        bu = (6.0 / (num_users + embedding_dim)) ** 0.5
        bi = (6.0 / (num_items + embedding_dim)) ** 0.5
        self.user_embedding = jax.random.uniform(
            ku, (num_users, embedding_dim), jnp.float32, -bu, bu)
        self.item_embedding = jax.random.uniform(
            ki, (num_items, embedding_dim), jnp.float32, -bi, bi)

        self.adjacency_matrix = None
        self._bipartite = False
        self._ui = self._iu = self._full = None
        self._matmul_dtype = jnp.bfloat16

    def set_adjacency_matrix(self, adjacency_matrix, *,
                             matmul_dtype=jnp.bfloat16):
        # TODO(synk): torch.sparse.mm exploits element-level COO sparsity;
        # here sparsity is exploited at the (t_m, t_k) block level via
        # block-CSR tables (finer granularity has no clean BlockSpec form).
        self.adjacency_matrix = adjacency_matrix
        self._matmul_dtype = matmul_dtype
        adj = jnp.asarray(adjacency_matrix)
        U = self.num_users
        D = self.embedding_dim
        uu = adj[:U, :U]
        ii = adj[U:, U:]
        # Bipartite fast path only if the diagonal blocks are exactly zero.
        self._bipartite = not bool(jnp.any(uu != 0) | jnp.any(ii != 0))
        if self._bipartite:
            self._ui = _prepare_spmm(adj[:U, U:], D, matmul_dtype)   # (U, I)
            self._iu = _prepare_spmm(adj[U:, :U], D, matmul_dtype)   # (I, U)
            self._full = None
        else:
            self._ui = self._iu = None
            self._full = _prepare_spmm(adj, D, matmul_dtype)

    def compute_embeddings(self):
        if self._bipartite:
            e_u = self.user_embedding.astype(self._matmul_dtype)
            e_i = self.item_embedding.astype(self._matmul_dtype)
            for _ in range(self.num_layers):
                new_u = spmm(self._ui, e_i)   # E'_users = R    @ E_items
                new_i = spmm(self._iu, e_u)   # E'_items = R^T  @ E_users
                e_u, e_i = new_u, new_i
            return e_u, e_i
        e = jnp.concatenate(
            [self.user_embedding, self.item_embedding], axis=0)
        e = e.astype(self._matmul_dtype)
        for _ in range(self.num_layers):
            e = spmm(self._full, e)
        return e[: self.num_users], e[self.num_users:]

    def forward(self, user_indices, item_indices):
        all_users, all_items = self.compute_embeddings()
        return score(all_users, all_items, user_indices, item_indices)


# ----------------------------------------------------------------------------
# Reference (pure JAX, same bf16-per-layer / f32-accumulation path)
# ----------------------------------------------------------------------------
def reference_forward(model, user_indices, item_indices):
    dt = model._matmul_dtype
    adj = jnp.asarray(model.adjacency_matrix).astype(dt)
    e = jnp.concatenate(
        [model.user_embedding, model.item_embedding], axis=0).astype(dt)
    for _ in range(model.num_layers):
        e = jnp.dot(adj, e, preferred_element_type=jnp.float32).astype(dt)
    e = e.astype(jnp.float32)
    u = e[: model.num_users][user_indices]
    v = e[model.num_users:][item_indices]
    return (u * v).sum(axis=1)


if __name__ == "__main__":
    num_users, num_items = 64, 64
    embedding_dim = 128
    num_layers = 2
    batch = 8

    key = jax.random.PRNGKey(0)
    k_model, k_graph, k_u, k_i = jax.random.split(key, 4)

    model = LightGCN(num_users, num_items, embedding_dim, num_layers, k_model)

    # Deterministic symmetric-normalized bipartite adjacency matrix.
    interactions = (jax.random.uniform(k_graph, (num_users, num_items))
                    < 0.1).astype(jnp.float32)
    N = num_users + num_items
    adj = jnp.zeros((N, N), jnp.float32)
    adj = adj.at[:num_users, num_users:].set(interactions)
    adj = adj.at[num_users:, :num_users].set(interactions.T)
    deg = adj.sum(axis=1)
    d_inv_sqrt = jnp.where(deg > 0, 1.0 / jnp.sqrt(jnp.maximum(deg, 1e-12)), 0.0)
    norm_adj = adj * d_inv_sqrt[:, None] * d_inv_sqrt[None, :]
    model.set_adjacency_matrix(norm_adj)

    user_indices = jax.random.randint(k_u, (batch,), 0, num_users)
    item_indices = jax.random.randint(k_i, (batch,), 0, num_items)

    out = model.forward(user_indices, item_indices)
    out = jax.block_until_ready(out)

    ref = reference_forward(model, user_indices, item_indices)
    assert out.shape == (batch,)
    assert jnp.allclose(out, ref, atol=1e-2, rtol=1e-2), (out, ref)

    print("KERNEL_OK")
</pallas_src>

<mosaic_0001>
module attributes {stable_mosaic.version = 11 : i64} {
  func.func @_spmm_kernel(%arg0: i32, %arg1: i32, %arg2: memref<1xi32, #tpu.memory_space<smem>>, %arg3: memref<1xi32, #tpu.memory_space<smem>>, %arg4: memref<128x128xbf16, #tpu.memory_space<vmem>>, %arg5: memref<128x128xbf16, #tpu.memory_space<vmem>>, %arg6: memref<128x128xbf16, #tpu.memory_space<vmem>>, %arg7: memref<128x128xf32, #tpu.memory_space<vmem>>) attributes {dimension_semantics = [#tpu.dimension_semantics<parallel>, #tpu.dimension_semantics<arbitrary>], iteration_bounds = array<i64: 1, 1>, scalar_prefetch = 2 : i64, scratch_operands = 1 : i64, tpu.core_type = #tpu.core_type<tc>, window_params = [{transform_indices = @transform_0, window_bounds = array<i64: 128, 128>}, {pipeline_mode = #tpu.pipeline_mode<synchronous>, transform_indices = @transform_1, window_bounds = array<i64: 128, 128>}, {transform_indices = @transform_2, window_bounds = array<i64: 128, 128>}]} {
    %c0_i32 = arith.constant 0 : i32
    %0 = arith.cmpi eq, %arg1, %c0_i32 : i32
    %1 = arith.extui %0 : i1 to i32
    %c0_i32_0 = arith.constant 0 : i32
    %2 = arith.cmpi ne, %1, %c0_i32_0 : i32
    scf.if %2 {
      %cst = arith.constant 0.000000e+00 : f32
      %11 = vector.broadcast %cst : f32 to vector<128x128xf32>
      %c0 = arith.constant 0 : index
      %c0_4 = arith.constant 0 : index
      %12 = vector.load %arg7[%c0, %c0_4] : memref<128x128xf32, #tpu.memory_space<vmem>>, vector<128x128xf32>
      tpu.vector_store %arg7[%c0, %c0_4], %11 {strides = array<i32>} : memref<128x128xf32, #tpu.memory_space<vmem>>, vector<128x128xf32>,
    } else {
    }
    %3 = arith.index_cast %arg0 : i32 to index
    %4 = memref.load %arg2[%3] : memref<1xi32, #tpu.memory_space<smem>>
    %5 = arith.cmpi slt, %arg1, %4 : i32
    %6 = arith.extui %5 : i1 to i32
    %c0_i32_1 = arith.constant 0 : i32
    %7 = arith.cmpi ne, %6, %c0_i32_1 : i32
    scf.if %7 {
      %c1_i32 = arith.constant 1 : i32
      %11 = arith.muli %arg0, %c1_i32 : i32
      %12 = arith.addi %11, %arg1 : i32
      %13 = arith.index_cast %12 : i32 to index
      %14 = memref.load %arg3[%13] : memref<1xi32, #tpu.memory_space<smem>>
      %c128_i32 = arith.constant 128 : i32
      %15 = arith.muli %14, %c128_i32 : i32
      %16 = tpu.assume_multiple %15, 128 : i32
      %17 = arith.index_cast %16 : i32 to index
      %c0 = arith.constant 0 : index
      %18 = vector.load %arg5[%17, %c0] : memref<128x128xbf16, #tpu.memory_space<vmem>>, vector<128x128xbf16>
      %c0_4 = arith.constant 0 : index
      %c0_5 = arith.constant 0 : index
      %19 = vector.load %arg7[%c0_4, %c0_5] : memref<128x128xf32, #tpu.memory_space<vmem>>, vector<128x128xf32>
      %c0_6 = arith.constant 0 : index
      %c0_7 = arith.constant 0 : index
      %20 = vector.load %arg4[%c0_6, %c0_7] : memref<128x128xbf16, #tpu.memory_space<vmem>>, vector<128x128xbf16>
      %cst = arith.constant dense<0.000000e+00> : vector<128x128xf32>
      %21 = tpu.matmul %20, %18, %cst {dimension_numbers = #tpu.dot_dimension_numbers<[1], [0], [0], [1], [0, 0, 1, 1], [], []>} : vector<128x128xbf16>, vector<128x128xbf16>, vector<128x128xf32> -> vector<128x128xf32>
      %22 = arith.addf %19, %21 : vector<128x128xf32>
      %c0_8 = arith.constant 0 : index
      %c0_9 = arith.constant 0 : index
      %23 = vector.load %arg7[%c0_8, %c0_9] : memref<128x128xf32, #tpu.memory_space<vmem>>, vector<128x128xf32>
      tpu.vector_store %arg7[%c0_8, %c0_9], %22 {strides = array<i32>} : memref<128x128xf32, #tpu.memory_space<vmem>>, vector<128x128xf32>,
    } else {
    }
    %c0_i32_2 = arith.constant 0 : i32
    %8 = arith.cmpi eq, %arg1, %c0_i32_2 : i32
    %9 = arith.extui %8 : i1 to i32
    %c0_i32_3 = arith.constant 0 : i32
    %10 = arith.cmpi ne, %9, %c0_i32_3 : i32
    scf.if %10 {
      %c0 = arith.constant 0 : index
      %c0_4 = arith.constant 0 : index
      %11 = vector.load %arg7[%c0, %c0_4] : memref<128x128xf32, #tpu.memory_space<vmem>>, vector<128x128xf32>
      %12 = arith.truncf %11 : vector<128x128xf32> to vector<128x128xbf16>
      %c0_5 = arith.constant 0 : index
      %c0_6 = arith.constant 0 : index
      %13 = vector.load %arg6[%c0_5, %c0_6] : memref<128x128xbf16, #tpu.memory_space<vmem>>, vector<128x128xbf16>
      tpu.vector_store %arg6[%c0_5, %c0_6], %12 {strides = array<i32>} : memref<128x128xbf16, #tpu.memory_space<vmem>>, vector<128x128xbf16>,
    } else {
    }
    return
  }
  func.func @transform_0(%arg0: i32, %arg1: i32, %arg2: memref<1xi32, #tpu.memory_space<smem>>, %arg3: memref<1xi32, #tpu.memory_space<smem>>) -> (i32, i32) {
    %c1_i32 = arith.constant 1 : i32
    %0 = arith.muli %arg0, %c1_i32 : i32
    %1 = arith.addi %0, %arg1 : i32
    %2 = arith.index_cast %1 : i32 to index
    %3 = memref.load %arg3[%2] : memref<1xi32, #tpu.memory_space<smem>>
    %c0_i32 = arith.constant 0 : i32
    return %arg0, %3 : i32, i32
  }
  func.func @transform_1(%arg0: i32, %arg1: i32, %arg2: memref<1xi32, #tpu.memory_space<smem>>, %arg3: memref<1xi32, #tpu.memory_space<smem>>) -> (i32, i32) {
    %c0_i32 = arith.constant 0 : i32
    %c0_i32_0 = arith.constant 0 : i32
    %c0_i32_1 = arith.constant 0 : i32
    return %c0_i32, %c0_i32_0 : i32, i32
  }
  func.func @transform_2(%arg0: i32, %arg1: i32, %arg2: memref<1xi32, #tpu.memory_space<smem>>, %arg3: memref<1xi32, #tpu.memory_space<smem>>) -> (i32, i32) {
    %c0_i32 = arith.constant 0 : i32
    %c0_i32_0 = arith.constant 0 : i32
    return %arg0, %c0_i32 : i32, i32
  }
}

</mosaic_0001>

<llo_original>
// kernel: tpu_custom_call.1
$region0: #{tpu_custom_call.1}
  #allocation0 [shape = 'u32[]', space=smem, size = 0x4, offset = 0x4, fixed_abs, tag = 'smem constant byte address 0x4 - core index']
  #allocation1 [shape = 'u32[144,128]{1,0:T(1,128)}', space=vmem, size = 0x12000, scoped, tag = 'internal scratch']
  #allocation2 [shape = 'f32[128,128]{1,0:T(8,128)}', space=vmem, size = 0x10000, scoped, tag = 'scratch operand']
  #allocation3 [shape = 's32[1]{0}', space=sflag, size = 0x4, scoped, tag = 'scoped memory for tpu_custom_call.1']
  #allocation4 [shape = 's32[1]{0:T(128)S(6)}', space=smem, size = 0x200, scoped, tag = 'prefetched SMEM operand 0']
  #allocation5 [shape = 's32[1]{0:T(128)S(6)}', space=smem, size = 0x200, scoped, tag = 'prefetched SMEM operand 1']
  %s0 = inlined_call_operand.<no memory space> [shape: s32[1], index: 0, kind: input, shape index: {}]
  %s1 = inlined_call_operand.<no memory space> [shape: s32[1], index: 1, kind: input, shape index: {}]
  %s2 = inlined_call_operand.hbm [shape: bf16[128,128], index: 2, kind: input, shape index: {}]
  %s3 = inlined_call_operand.hbm [shape: bf16[128,128], index: 3, kind: input, shape index: {}]
  %s4 = inlined_call_operand.hbm [shape: bf16[128,128], index: 4, kind: output, shape index: {}]
  %s5 = sld [smem:[#allocation0]]
  $region38: #{tpu_custom_call.1} parent=0
    _
  %s7 = ssub.s32 1, %s5
  %s8 = scalar_select 0, %s7, %s5
  %9 = sst [smem:[#allocation4]] %s0
  %10 = sst [smem:[#allocation5]] %s1
  $region1: #{tpu_custom_call.1} parent=0
    #allocation6 [shape = 'u8[32768]{0}', space=vmem, size = 0x8000, scoped, tag = 'input window, operand 2, single buffered']
    #allocation7 [shape = 's32[1]{0}', space=sflag, size = 0x4, scoped, tag = 'scoped memory for tpu_custom_call.1']
    #allocation8 [shape = 's32[1]{0}', space=sflag, size = 0x4, scoped, tag = 'scoped memory for tpu_custom_call.1']
    #allocation9 [shape = 'u8[32768]{0}', space=vmem, size = 0x8000, scoped, tag = 'input window, operand 3, single buffered']
    #allocation10 [shape = 's32[1]{0}', space=sflag, size = 0x4, scoped, tag = 'scoped memory for tpu_custom_call.1']
    #allocation11 [shape = 'u8[32768]{0}', space=vmem, size = 0x8000, scoped, tag = 'output window, operand 0, single buffered']
    %11 = vsyncpa [#allocation7], 0
    %12 = vsyncpa [#allocation10], 0
    %13 = vsyncpa [#allocation8], 0
    // Predicated region
    $region2: #{tpu_custom_call.1} parent=1 // pred_check
      _
    $region3: #{tpu_custom_call.1} parent=1 // pred_check_branch
      %15 = sbr.rel (0) target = $region5
    $region4: #{tpu_custom_call.1} parent=1 // pred_region
      %s16 = sadd.s32 0, 0
      %s17 = sld [smem:[#allocation5 + %s16]]
      %s19 = ssub.s32 1024, 1024
      %20 = vsyncadd [#allocation7], %s19
      %s21 = smul.addr %s17, 64
      %s22 = scalar_lea.hbm %s2, %s21
      %s23 = sshll.u32 [#allocation6], 4
      %s24 = int_to_ptr.vmem [resolvable:$true] %s23
      %29 = dma.hbm_to_vmem [thread:$0]  %s22, 1024, %s24, [#allocation7], 64, 64, 4
    $region5: #{tpu_custom_call.1} parent=1 // pred_fallthru
      _
    // Predicated region
    $region6: #{tpu_custom_call.1} parent=1 // pred_check
      _
    $region7: #{tpu_custom_call.1} parent=1 // pred_check_branch
      %31 = sbr.rel (0) target = $region9
    $region8: #{tpu_custom_call.1} parent=1 // pred_region
      %s33 = ssub.s32 1024, 1024
      %34 = vsyncadd [#allocation10], %s33
      %s35 = sshll.u32 [#allocation9], 4
      %s36 = int_to_ptr.vmem [resolvable:$true] %s35
      %41 = dma.hbm_to_vmem [thread:$0]  %s3, 1024, %s36, [#allocation10], 64, 64, 4
    $region9: #{tpu_custom_call.1} parent=1 // pred_fallthru
      _
    // Predicated region
    $region10: #{tpu_custom_call.1} parent=1 // pred_check
      _
    $region11: #{tpu_custom_call.1} parent=1 // pred_check_branch
      %43 = sbr.rel (0) target = $region13
    $region12: #{tpu_custom_call.1} parent=1 // pred_region
      %44 = dma.done [#allocation7], 1024
    $region13: #{tpu_custom_call.1} parent=1 // pred_fallthru
      _
    // Predicated region
    $region14: #{tpu_custom_call.1} parent=1 // pred_check
      _
    $region15: #{tpu_custom_call.1} parent=1 // pred_check_branch
      %46 = sbr.rel (0) target = $region17
    $region16: #{tpu_custom_call.1} parent=1 // pred_region
      %47 = dma.done [#allocation10], 1024
    $region17: #{tpu_custom_call.1} parent=1 // pred_fallthru
      _
    %s48 = sadd.s32 0, 0
    %s49 = sld [smem:[#allocation5 + %s48]]
    %p51 = scmp.eq.s32.totalorder 0, 0
    // Predicated region
    $region18: #{tpu_custom_call.1} parent=1 // pred_check
      %p52 = pneg %p51
    $region19: #{tpu_custom_call.1} parent=1 // pred_check_branch
      %54 = sbr.rel (%p52) target = $region21
    $region20: #{tpu_custom_call.1} parent=1 // pred_region
      %55 = vst [vmem:[#allocation2] sm:$0xff] 0.0
      %56 = vst [vmem:[#allocation2 + $0x8] sm:$0xff] 0.0
      %57 = vst [vmem:[#allocation2 + $0x10] sm:$0xff] 0.0
      %58 = vst [vmem:[#allocation2 + $0x18] sm:$0xff] 0.0
      %59 = vst [vmem:[#allocation2 + $0x20] sm:$0xff] 0.0
      %60 = vst [vmem:[#allocation2 + $0x28] sm:$0xff] 0.0
      %61 = vst [vmem:[#allocation2 + $0x30] sm:$0xff] 0.0
      %62 = vst [vmem:[#allocation2 + $0x38] sm:$0xff] 0.0
      %63 = vst [vmem:[#allocation2 + $0x40] sm:$0xff] 0.0
      %64 = vst [vmem:[#allocation2 + $0x48] sm:$0xff] 0.0
      %65 = vst [vmem:[#allocation2 + $0x50] sm:$0xff] 0.0
      %66 = vst [vmem:[#allocation2 + $0x58] sm:$0xff] 0.0
      %67 = vst [vmem:[#allocation2 + $0x60] sm:$0xff] 0.0
      %68 = vst [vmem:[#allocation2 + $0x68] sm:$0xff] 0.0
      %69 = vst [vmem:[#allocation2 + $0x70] sm:$0xff] 0.0
      %70 = vst [vmem:[#allocation2 + $0x78] sm:$0xff] 0.0
    $region21: #{tpu_custom_call.1} parent=1 // pred_fallthru
      _
    %s71 = sld [smem:[#allocation4]]
    %p72 = scmp.lt.s32.totalorder 0, %s71
    // Predicated region
    $region22: #{tpu_custom_call.1} parent=1 // pred_check
      %p73 = pneg %p72
    $region23: #{tpu_custom_call.1} parent=1 // pred_check_branch
      %75 = sbr.rel (%p73) target = $region25
    $region24: #{tpu_custom_call.1} parent=1 // pred_region
      %s76 = sadd.s32 0, 0
      %s77 = sld [smem:[#allocation5 + %s76]]
      %s78 = smul.u32 %s77, 128
      %s79 = sshra.s32 %s78, 3
      %s80 = sand.u32 %s78, 7
      %s81 = smul.addr %s79, 4
      %s82 = scalar_lea.vmem [#allocation9], %s81
      %v83 = vld [vmem:[%s82] sm:$0xf]
      %v84 = vld [vmem:[%s82 + $0x4] sm:$0xf]
      %v85 = vld [vmem:[%s82 + $0x8] sm:$0xf]
      %v86 = vld [vmem:[%s82 + $0xc] sm:$0xf]
      %v87 = vld [vmem:[%s82 + $0x10] sm:$0xf]
      %v88 = vld [vmem:[%s82 + $0x14] sm:$0xf]
      %v89 = vld [vmem:[%s82 + $0x18] sm:$0xf]
      %v90 = vld [vmem:[%s82 + $0x1c] sm:$0xf]
      %v91 = vld [vmem:[%s82 + $0x20] sm:$0xf]
      %v92 = vld [vmem:[%s82 + $0x24] sm:$0xf]
      %v93 = vld [vmem:[%s82 + $0x28] sm:$0xf]
      %v94 = vld [vmem:[%s82 + $0x2c] sm:$0xf]
      %v95 = vld [vmem:[%s82 + $0x30] sm:$0xf]
      %v96 = vld [vmem:[%s82 + $0x34] sm:$0xf]
      %v97 = vld [vmem:[%s82 + $0x38] sm:$0xf]
      %v98 = vld [vmem:[%s82 + $0x3c] sm:$0xf]
      %v99 = vld [vmem:[#allocation2] sm:$0xff]
      %v100 = vld [vmem:[#allocation2 + $0x8] sm:$0xff]
      %v101 = vld [vmem:[#allocation2 + $0x10] sm:$0xff]
      %v102 = vld [vmem:[#allocation2 + $0x18] sm:$0xff]
      %v103 = vld [vmem:[#allocation2 + $0x20] sm:$0xff]
      %v104 = vld [vmem:[#allocation2 + $0x28] sm:$0xff]
      %v105 = vld [vmem:[#allocation2 + $0x30] sm:$0xff]
      %v106 = vld [vmem:[#allocation2 + $0x38] sm:$0xff]
      %v107 = vld [vmem:[#allocation2 + $0x40] sm:$0xff]
      %v108 = vld [vmem:[#allocation2 + $0x48] sm:$0xff]
      %v109 = vld [vmem:[#allocation2 + $0x50] sm:$0xff]
      %v110 = vld [vmem:[#allocation2 + $0x58] sm:$0xff]
      %v111 = vld [vmem:[#allocation2 + $0x60] sm:$0xff]
      %v112 = vld [vmem:[#allocation2 + $0x68] sm:$0xff]
      %v113 = vld [vmem:[#allocation2 + $0x70] sm:$0xff]
      %v114 = vld [vmem:[#allocation2 + $0x78] sm:$0xff]
      %v115 = vld [vmem:[#allocation6] sm:$0xf]
      %v116 = vld [vmem:[#allocation6 + $0x4] sm:$0xf]
      %v117 = vld [vmem:[#allocation6 + $0x8] sm:$0xf]
      %v118 = vld [vmem:[#allocation6 + $0xc] sm:$0xf]
      %v119 = vld [vmem:[#allocation6 + $0x10] sm:$0xf]
      %v120 = vld [vmem:[#allocation6 + $0x14] sm:$0xf]
      %v121 = vld [vmem:[#allocation6 + $0x18] sm:$0xf]
      %v122 = vld [vmem:[#allocation6 + $0x1c] sm:$0xf]
      %v123 = vld [vmem:[#allocation6 + $0x20] sm:$0xf]
      %v124 = vld [vmem:[#allocation6 + $0x24] sm:$0xf]
      %v125 = vld [vmem:[#allocation6 + $0x28] sm:$0xf]
      %v126 = vld [vmem:[#allocation6 + $0x2c] sm:$0xf]
      %v127 = vld [vmem:[#allocation6 + $0x30] sm:$0xf]
      %v128 = vld [vmem:[#allocation6 + $0x34] sm:$0xf]
      %v129 = vld [vmem:[#allocation6 + $0x38] sm:$0xf]
      %v130 = vld [vmem:[#allocation6 + $0x3c] sm:$0xf]
      %v147 = vunpack.c.l.b16 %v115
      %v148 = vunpack.c.l.b16 %v116
      %v149 = vunpack.c.l.b16 %v117
      %v150 = vunpack.c.l.b16 %v118
      %v151 = vunpack.c.l.b16 %v119
      %v152 = vunpack.c.l.b16 %v120
      %v153 = vunpack.c.l.b16 %v121
      %v154 = vunpack.c.l.b16 %v122
      %v155 = vunpack.c.l.b16 %v123
      %v156 = vunpack.c.l.b16 %v124
      %v157 = vunpack.c.l.b16 %v125
      %v158 = vunpack.c.l.b16 %v126
      %v159 = vunpack.c.l.b16 %v127
      %v160 = vunpack.c.l.b16 %v128
      %v161 = vunpack.c.l.b16 %v129
      %v162 = vunpack.c.l.b16 %v130
      %v163 = vpack.c.b16 %v148, %v147
      %v164 = vpack.c.b16 %v150, %v149
      %v165 = vpack.c.b16 %v152, %v151
      %v166 = vpack.c.b16 %v154, %v153
      %v167 = vpack.c.b16 %v156, %v155
      %v168 = vpack.c.b16 %v158, %v157
      %v169 = vpack.c.b16 %v160, %v159
      %v170 = vpack.c.b16 %v162, %v161
      %v195 = vunpack.c.l.b16 %v83
      %v196 = vunpack.c.l.b16 %v84
      %v197 = vunpack.c.l.b16 %v85
      %v198 = vunpack.c.l.b16 %v86
      %v199 = vunpack.c.l.b16 %v87
      %v200 = vunpack.c.l.b16 %v88
      %v201 = vunpack.c.l.b16 %v89
      %v202 = vunpack.c.l.b16 %v90
      %v203 = vunpack.c.l.b16 %v91
      %v204 = vunpack.c.l.b16 %v92
      %v205 = vunpack.c.l.b16 %v93
      %v206 = vunpack.c.l.b16 %v94
      %v207 = vunpack.c.l.b16 %v95
      %v208 = vunpack.c.l.b16 %v96
      %v209 = vunpack.c.l.b16 %v97
      %v210 = vunpack.c.l.b16 %v98
      %v211 = vpack.c.b16 %v196, %v195
      %v212 = vpack.c.b16 %v198, %v197
      %v213 = vpack.c.b16 %v200, %v199
      %v214 = vpack.c.b16 %v202, %v201
      %v215 = vpack.c.b16 %v204, %v203
      %v216 = vpack.c.b16 %v206, %v205
      %v217 = vpack.c.b16 %v208, %v207
      %v218 = vpack.c.b16 %v210, %v209
      %227 = vmatprep.subr.bf16.mxu0 0
      %228 = vmatpush1.bf16.msra.mxu0 %v211
      %229 = vmatprep.subr.bf16.mxu0 0
      %230 = vmatpush1.bf16.msra.mxu0 %v212
      %231 = vmatprep.subr.bf16.mxu0 0
      %232 = vmatpush1.bf16.msra.mxu0 %v213
      %233 = vmatprep.subr.bf16.mxu0 0
      %234 = vmatpush1.bf16.msra.mxu0 %v214
      %235 = vmatprep.subr.bf16.mxu0 0
      %236 = vmatpush1.bf16.msra.mxu0 %v215
      %237 = vmatprep.subr.bf16.mxu0 0
      %238 = vmatpush1.bf16.msra.mxu0 %v216
      %239 = vmatprep.subr.bf16.mxu0 0
      %240 = vmatpush1.bf16.msra.mxu0 %v217
      %241 = vmatprep.subr.bf16.mxu0 0
      %242 = vmatpush1.bf16.msra.mxu0 %v218
      %243 = vmatprep.subr.bf16.mxu0 0
      %244 = vmatpush1.bf16.msra.mxu0 0
      %245 = vmatprep.subr.bf16.mxu0 0
      %246 = vmatpush1.bf16.msra.mxu0 0
      %247 = vmatprep.subr.bf16.mxu0 0
      %248 = vmatpush1.bf16.msra.mxu0 0
      %249 = vmatprep.subr.bf16.mxu0 0
      %250 = vmatpush1.bf16.msra.mxu0 0
      %251 = vmatprep.subr.bf16.mxu0 0
      %252 = vmatpush1.bf16.msra.mxu0 0
      %253 = vmatprep.subr.bf16.mxu0 0
      %254 = vmatpush1.bf16.msra.mxu0 0
      %255 = vmatprep.subr.bf16.mxu0 0
      %256 = vmatpush1.bf16.msra.mxu0 0
      %257 = vmatprep.subr.bf16.mxu0 0
      %258 = vmatpush1.bf16.msra.mxu0 0
      %259 = vmatprep.mubr.bf16.mxu0 0
      %260 = vmatmul.mubr.bf16.gmra.mrb[0].mxu0 %v163
      %v261 = vpop.f32.mrb[0].mxu0
      %v262 = vadd.f32 0.0, %v261
      %v263 = vpop.f32.mrb[0].mxu0
      %v264 = vpop.f32.mrb[0].mxu0
      %v265 = vadd.f32 0.0, %v264
      %v266 = vpop.f32.mrb[0].mxu0
      %267 = vmatprep.mubr.bf16.mxu0 0
      %268 = vmatmul.mubr.bf16.gmra.mrb[0].mxu0 %v164
      %v269 = vpop.f32.mrb[0].mxu0
      %v270 = vadd.f32 0.0, %v269
      %v271 = vpop.f32.mrb[0].mxu0
      %v272 = vpop.f32.mrb[0].mxu0
      %v273 = vadd.f32 0.0, %v272
      %v274 = vpop.f32.mrb[0].mxu0
      %275 = vmatprep.mubr.bf16.mxu0 0
      %276 = vmatmul.mubr.bf16.gmra.mrb[0].mxu0 %v165
      %v277 = vpop.f32.mrb[0].mxu0
      %v278 = vadd.f32 0.0, %v277
      %v279 = vpop.f32.mrb[0].mxu0
      %v280 = vpop.f32.mrb[0].mxu0
      %v281 = vadd.f32 0.0, %v280
      %v282 = vpop.f32.mrb[0].mxu0
      %283 = vmatprep.mubr.bf16.mxu0 0
      %284 = vmatmul.mubr.bf16.gmra.mrb[0].mxu0 %v166
      %v285 = vpop.f32.mrb[0].mxu0
      %v286 = vadd.f32 0.0, %v285
      %v287 = vpop.f32.mrb[0].mxu0
      %v288 = vpop.f32.mrb[0].mxu0
      %v289 = vadd.f32 0.0, %v288
      %v290 = vpop.f32.mrb[0].mxu0
      %291 = vmatprep.mubr.bf16.mxu0 0
      %292 = vmatmul.mubr.bf16.gmra.mrb[0].mxu0 %v167
      %v293 = vpop.f32.mrb[0].mxu0
      %v294 = vadd.f32 0.0, %v293
      %v295 = vpop.f32.mrb[0].mxu0
      %v296 = vpop.f32.mrb[0].mxu0
      %v297 = vadd.f32 0.0, %v296
      %v298 = vpop.f32.mrb[0].mxu0
      %299 = vmatprep.mubr.bf16.mxu0 0
      %300 = vmatmul.mubr.bf16.gmra.mrb[0].mxu0 %v168
      %v301 = vpop.f32.mrb[0].mxu0
      %v302 = vadd.f32 0.0, %v301
      %v303 = vpop.f32.mrb[0].mxu0
      %v304 = vpop.f32.mrb[0].mxu0
      %v305 = vadd.f32 0.0, %v304
      %v306 = vpop.f32.mrb[0].mxu0
      %307 = vmatprep.mubr.bf16.mxu0 0
      %308 = vmatmul.mubr.bf16.gmra.mrb[0].mxu0 %v169
      %v309 = vpop.f32.mrb[0].mxu0
      %v310 = vadd.f32 0.0, %v309
      %v311 = vpop.f32.mrb[0].mxu0
      %v312 = vpop.f32.mrb[0].mxu0
      %v313 = vadd.f32 0.0, %v312
      %v314 = vpop.f32.mrb[0].mxu0
      %315 = vmatprep.mubr.bf16.mxu0 0
      %316 = vmatmul.mubr.bf16.gmra.mrb[0].mxu0 %v170
      %v317 = vpop.f32.mrb[0].mxu0
      %v318 = vadd.f32 0.0, %v317
      %v319 = vpop.f32.mrb[0].mxu0
      %v320 = vpop.f32.mrb[0].mxu0
      %v321 = vadd.f32 0.0, %v320
      %v322 = vpop.f32.mrb[0].mxu0
      %323 = vdwg.mxu0
      %v324 = vadd.f32 %v99, %v262
      %v325 = vadd.f32 %v100, %v265
      %v326 = vadd.f32 %v101, %v270
      %v327 = vadd.f32 %v102, %v273
      %v328 = vadd.f32 %v103, %v278
      %v329 = vadd.f32 %v104, %v281
      %v330 = vadd.f32 %v105, %v286
      %v331 = vadd.f32 %v106, %v289
      %v332 = vadd.f32 %v107, %v294
      %v333 = vadd.f32 %v108, %v297
      %v334 = vadd.f32 %v109, %v302
      %v335 = vadd.f32 %v110, %v305
      %v336 = vadd.f32 %v111, %v310
      %v337 = vadd.f32 %v112, %v313
      %v338 = vadd.f32 %v113, %v318
      %v339 = vadd.f32 %v114, %v321
      %340 = vst [vmem:[#allocation2] sm:$0xff] %v324
      %341 = vst [vmem:[#allocation2 + $0x8] sm:$0xff] %v325
      %342 = vst [vmem:[#allocation2 + $0x10] sm:$0xff] %v326
      %343 = vst [vmem:[#allocation2 + $0x18] sm:$0xff] %v327
      %344 = vst [vmem:[#allocation2 + $0x20] sm:$0xff] %v328
      %345 = vst [vmem:[#allocation2 + $0x28] sm:$0xff] %v329
      %346 = vst [vmem:[#allocation2 + $0x30] sm:$0xff] %v330
      %347 = vst [vmem:[#allocation2 + $0x38] sm:$0xff] %v331
      %348 = vst [vmem:[#allocation2 + $0x40] sm:$0xff] %v332
      %349 = vst [vmem:[#allocation2 + $0x48] sm:$0xff] %v333
      %350 = vst [vmem:[#allocation2 + $0x50] sm:$0xff] %v334
      %351 = vst [vmem:[#allocation2 + $0x58] sm:$0xff] %v335
      %352 = vst [vmem:[#allocation2 + $0x60] sm:$0xff] %v336
      %353 = vst [vmem:[#allocation2 + $0x68] sm:$0xff] %v337
      %354 = vst [vmem:[#allocation2 + $0x70] sm:$0xff] %v338
      %355 = vst [vmem:[#allocation2 + $0x78] sm:$0xff] %v339
    $region25: #{tpu_custom_call.1} parent=1 // pred_fallthru
      _
    // Predicated region
    $region26: #{tpu_custom_call.1} parent=1 // pred_check
      %p356 = pneg %p51
    $region27: #{tpu_custom_call.1} parent=1 // pred_check_branch
      %358 = sbr.rel (%p356) target = $region29
    $region28: #{tpu_custom_call.1} parent=1 // pred_region
      %v359 = vld [vmem:[#allocation2] sm:$0xff]
      %v360 = vld [vmem:[#allocation2 + $0x8] sm:$0xff]
      %v361 = vld [vmem:[#allocation2 + $0x10] sm:$0xff]
      %v362 = vld [vmem:[#allocation2 + $0x18] sm:$0xff]
      %v363 = vld [vmem:[#allocation2 + $0x20] sm:$0xff]
      %v364 = vld [vmem:[#allocation2 + $0x28] sm:$0xff]
      %v365 = vld [vmem:[#allocation2 + $0x30] sm:$0xff]
      %v366 = vld [vmem:[#allocation2 + $0x38] sm:$0xff]
      %v367 = vld [vmem:[#allocation2 + $0x40] sm:$0xff]
      %v368 = vld [vmem:[#allocation2 + $0x48] sm:$0xff]
      %v369 = vld [vmem:[#allocation2 + $0x50] sm:$0xff]
      %v370 = vld [vmem:[#allocation2 + $0x58] sm:$0xff]
      %v371 = vld [vmem:[#allocation2 + $0x60] sm:$0xff]
      %v372 = vld [vmem:[#allocation2 + $0x68] sm:$0xff]
      %v373 = vld [vmem:[#allocation2 + $0x70] sm:$0xff]
      %v374 = vld [vmem:[#allocation2 + $0x78] sm:$0xff]
      %v375 = vpack.c.bf16 %v360, %v359
      %v376 = vpack.c.bf16 %v362, %v361
      %v377 = vpack.c.bf16 %v364, %v363
      %v378 = vpack.c.bf16 %v366, %v365
      %v379 = vpack.c.bf16 %v368, %v367
      %v380 = vpack.c.bf16 %v370, %v369
      %v381 = vpack.c.bf16 %v372, %v371
      %v382 = vpack.c.bf16 %v374, %v373
      %v391 = vunpack.c.l.b16 %v375
      %v392 = vunpack.c.h.b16 %v375
      %v393 = vunpack.c.l.b16 %v376
      %v394 = vunpack.c.h.b16 %v376
      %v395 = vunpack.c.l.b16 %v377
      %v396 = vunpack.c.h.b16 %v377
      %v397 = vunpack.c.l.b16 %v378
      %v398 = vunpack.c.h.b16 %v378
      %v399 = vunpack.c.l.b16 %v379
      %v400 = vunpack.c.h.b16 %v379
      %v401 = vunpack.c.l.b16 %v380
      %v402 = vunpack.c.h.b16 %v380
      %v403 = vunpack.c.l.b16 %v381
      %v404 = vunpack.c.h.b16 %v381
      %v405 = vunpack.c.l.b16 %v382
      %v406 = vunpack.c.h.b16 %v382
      %v407 = vpack.c.b16 %v391, %v391
      %v408 = vpack.c.b16 %v392, %v392
      %v409 = vpack.c.b16 %v393, %v393
      %v410 = vpack.c.b16 %v394, %v394
      %v411 = vpack.c.b16 %v395, %v395
      %v412 = vpack.c.b16 %v396, %v396
      %v413 = vpack.c.b16 %v397, %v397
      %v414 = vpack.c.b16 %v398, %v398
      %v415 = vpack.c.b16 %v399, %v399
      %v416 = vpack.c.b16 %v400, %v400
      %v417 = vpack.c.b16 %v401, %v401
      %v418 = vpack.c.b16 %v402, %v402
      %v419 = vpack.c.b16 %v403, %v403
      %v420 = vpack.c.b16 %v404, %v404
      %v421 = vpack.c.b16 %v405, %v405
      %v422 = vpack.c.b16 %v406, %v406
      %439 = vst [vmem:[#allocation11] sm:$0xf] %v407
      %440 = vst [vmem:[#allocation11 + $0x4] sm:$0xf] %v408
      %441 = vst [vmem:[#allocation11 + $0x8] sm:$0xf] %v409
      %442 = vst [vmem:[#allocation11 + $0xc] sm:$0xf] %v410
      %443 = vst [vmem:[#allocation11 + $0x10] sm:$0xf] %v411
      %444 = vst [vmem:[#allocation11 + $0x14] sm:$0xf] %v412
      %445 = vst [vmem:[#allocation11 + $0x18] sm:$0xf] %v413
      %446 = vst [vmem:[#allocation11 + $0x1c] sm:$0xf] %v414
      %447 = vst [vmem:[#allocation11 + $0x20] sm:$0xf] %v415
      %448 = vst [vmem:[#allocation11 + $0x24] sm:$0xf] %v416
      %449 = vst [vmem:[#allocation11 + $0x28] sm:$0xf] %v417
      %450 = vst [vmem:[#allocation11 + $0x2c] sm:$0xf] %v418
      %451 = vst [vmem:[#allocation11 + $0x30] sm:$0xf] %v419
      %452 = vst [vmem:[#allocation11 + $0x34] sm:$0xf] %v420
      %453 = vst [vmem:[#allocation11 + $0x38] sm:$0xf] %v421
      %454 = vst [vmem:[#allocation11 + $0x3c] sm:$0xf] %v422
    $region29: #{tpu_custom_call.1} parent=1 // pred_fallthru
      _
    // Predicated region
    $region30: #{tpu_custom_call.1} parent=1 // pred_check
      _
    $region31: #{tpu_custom_call.1} parent=1 // pred_check_branch
      %456 = sbr.rel (0) target = $region33
    $region32: #{tpu_custom_call.1} parent=1 // pred_region
      %s458 = ssub.s32 1024, 1024
      %459 = vsyncadd [#allocation8], %s458
      %s460 = sshll.u32 [#allocation11], 4
      %s461 = int_to_ptr.vmem [resolvable:$true] %s460
      %466 = dma.vmem_to_hbm [thread:$0]  %s461, 1024, %s4, [#allocation8], 64, 64, 4
    $region33: #{tpu_custom_call.1} parent=1 // pred_fallthru
      _
    // Predicated region
    $region34: #{tpu_custom_call.1} parent=1 // pred_check
      _
    $region35: #{tpu_custom_call.1} parent=1 // pred_check_branch
      %468 = sbr.rel (0) target = $region37
    $region36: #{tpu_custom_call.1} parent=1 // pred_region
      %469 = dma.done [#allocation8], 1024
    $region37: #{tpu_custom_call.1} parent=1 // pred_fallthru
      _
    %470 = vsyncpa [#allocation7], 1
    %471 = vsyncpa [#allocation10], 1
    %472 = vsyncpa [#allocation8], 1

</llo_original>
